<compile_context>
chip_gen: v5e
topology: v5e:2x2
jax: 0.10.0
libtpu: 0.0.40
codegen_flags: <defaults>
</compile_context>

<pallas_src>
import functools

import jax
import jax.numpy as jnp
from jax.experimental import pallas as pl
from jax.experimental.pallas import tpu as pltpu

_NUM_CORE_SHARDS = 2                   # v7x has 2 TensorCores; extra shard is harmless on 1-TC chips
_TARGET_BLOCK_BYTES = 1 * 1024 * 1024  # ~1 MiB per input block per pipeline buffer


def _kl_loss_kernel(x_ref, y_ref, out_ref, *, n_rows, row_tile, tiles_per_core,
                    faithful):
    c = pl.program_id(0)   # core shard
    i = pl.program_id(1)   # row-tile step within the shard

    # Output block index depends only on c -> it stays resident across the
    # i (reduction) axis and acts as the accumulator.
    @pl.when(i == 0)
    def _init():
        out_ref[...] = jnp.zeros_like(out_ref)

    x = x_ref[...].astype(jnp.float32)
    y = y_ref[...].astype(jnp.float32)

    def log_softmax(a):
        m = jnp.max(a, axis=-1, keepdims=True)
        s = jnp.sum(jnp.exp(a - m), axis=-1, keepdims=True)
        return a - (m + jnp.log(s))

    xl = log_softmax(x)
    yl = log_softmax(y)

    if faithful:
        # torch.xlogy(target, target): 0 where target == 0, else t*log(t).
        xlogy_yy = jnp.where(yl == 0.0, jnp.zeros_like(yl), yl * jnp.log(yl))
        elem = xlogy_yy - yl * xl          # pointwise KLDivLoss term (NaN-faithful)
    else:
        # Mathematically intended KL: p * (log p - log q), p = exp(yl).
        elem = jnp.exp(yl) * (yl - xl)

    # Zero rows past the end of the array (tail tile / idle shard steps).
    row_start = (c * tiles_per_core + i) * row_tile
    row_ids = row_start + jax.lax.broadcasted_iota(jnp.int32, (row_tile, 1), 0)
    elem = jnp.where(row_ids < n_rows, elem, 0.0)

    # Lane-parallel partial sum: reduce only over the row (sublane) axis here;
    # the cheap final cross-lane reduce happens once, in the wrapper.
    out_ref[...] += jnp.sum(elem, axis=0, keepdims=True)


def kl_loss(x, y, *, row_tile=None, faithful=True):
    """x, y: (N, C) logits; softmax over axis 1. Returns scalar f32 loss."""
    assert x.shape == y.shape and x.ndim == 2
    N, C = x.shape
    itemsize = max(jnp.dtype(x.dtype).itemsize, jnp.dtype(y.dtype).itemsize)

    if row_tile is None:
        # Large row tile: ~1 MiB per input block, multiple of 16 (bf16-safe
        # sublane tiling); collapse to the full array when it is small
        # (a full-extent block is always layout-legal).
        row_tile = _TARGET_BLOCK_BYTES // (C * itemsize)
        row_tile = max(16, (row_tile // 16) * 16)
        if row_tile >= N:
            row_tile = N

    tiles_total = pl.cdiv(N, row_tile)
    tiles_per_core = pl.cdiv(tiles_total, _NUM_CORE_SHARDS)

    def in_index_map(c, i):
        # Clamp so idle shard steps re-read the last valid block; their
        # contribution is masked to zero inside the kernel.
        return (jnp.minimum(c * tiles_per_core + i, tiles_total - 1), 0)

    kernel = functools.partial(
        _kl_loss_kernel,
        n_rows=N, row_tile=row_tile, tiles_per_core=tiles_per_core,
        faithful=faithful,
    )

    cost = pl.CostEstimate(
        flops=8 * N * C,
        transcendentals=3 * N * C,
        bytes_accessed=2 * N * C * itemsize + _NUM_CORE_SHARDS * C * 4,
    )

    partials = pl.pallas_call(
        kernel,
        out_shape=jax.ShapeDtypeStruct((_NUM_CORE_SHARDS, 1, C), jnp.float32),
        grid=(_NUM_CORE_SHARDS, tiles_per_core),
        in_specs=[
            pl.BlockSpec((row_tile, C), in_index_map),
            pl.BlockSpec((row_tile, C), in_index_map),
        ],
        out_specs=pl.BlockSpec((1, 1, C), lambda c, i: (c, 0, 0)),
        compiler_params=pltpu.CompilerParams(
            dimension_semantics=("parallel", "arbitrary"),
            vmem_limit_bytes=32 * 1024 * 1024,
        ),
        cost_estimate=cost,
    )(x, y)

    # Final tiny reduction + 'mean' over all elements (KLDivLoss default).
    return jnp.sum(partials) / jnp.float32(N * C)


def _ref_loss(x, y, faithful=True):
    xl = jax.nn.log_softmax(x, axis=1)
    yl = jax.nn.log_softmax(y, axis=1)
    if faithful:
        xlogy_yy = jnp.where(yl == 0.0, 0.0, yl * jnp.log(yl))
        return jnp.mean(xlogy_yy - yl * xl)
    return jnp.mean(jnp.exp(yl) * (yl - xl))


if __name__ == "__main__":
    key = jax.random.PRNGKey(0)
    kx, ky = jax.random.split(key)

    # Case 1: faithful PyTorch semantics (result is NaN by design, since the
    # module passes log-probabilities as the KLDivLoss target).
    N, C = 16, 128
    x = jax.random.normal(kx, (N, C), dtype=jnp.float32)
    y = jax.random.normal(ky, (N, C), dtype=jnp.float32)
    loss = kl_loss(x, y)
    jax.block_until_ready(loss)
    ref = _ref_loss(x, y)
    if not bool(jnp.allclose(loss, ref, rtol=1e-5, atol=1e-6, equal_nan=True)):
        raise SystemExit(f"MISMATCH (faithful): kernel={loss} ref={ref}")

    # Case 2: finite-valued variant with a non-divisible N and a small forced
    # row tile, to numerically validate multi-tile accumulation, tail-row
    # masking, and the idle-shard clamp path.
    N2, C2 = 40, 64
    k2x, k2y = jax.random.split(jax.random.PRNGKey(1))
    x2 = jax.random.normal(k2x, (N2, C2), dtype=jnp.float32)
    y2 = jax.random.normal(k2y, (N2, C2), dtype=jnp.float32)
    loss2 = kl_loss(x2, y2, row_tile=16, faithful=False)
    jax.block_until_ready(loss2)
    ref2 = _ref_loss(x2, y2, faithful=False)
    if not bool(jnp.allclose(loss2, ref2, rtol=2e-5, atol=1e-6)):
        raise SystemExit(f"MISMATCH (finite): kernel={loss2} ref={ref2}")

    print("KERNEL_OK")
</pallas_src>

<mosaic_0001>
module attributes {stable_mosaic.version = 11 : i64} {
  func.func @_kl_loss_kernel(%arg0: i32, %arg1: i32, %arg2: memref<16x128xf32, #tpu.memory_space<vmem>>, %arg3: memref<16x128xf32, #tpu.memory_space<vmem>>, %arg4: memref<1x1x128xf32, #tpu.memory_space<vmem>>) attributes {dimension_semantics = [#tpu.dimension_semantics<parallel>, #tpu.dimension_semantics<arbitrary>], iteration_bounds = array<i64: 2, 1>, scalar_prefetch = 0 : i64, scratch_operands = 0 : i64, tpu.core_type = #tpu.core_type<tc>, window_params = [{transform_indices = @transform_0, window_bounds = array<i64: 16, 128>}, {transform_indices = @transform_1, window_bounds = array<i64: 16, 128>}, {transform_indices = @transform_2, window_bounds = array<i64: 1, 1, 128>}]} {
    %c0_i32 = arith.constant 0 : i32
    %0 = arith.cmpi eq, %arg1, %c0_i32 : i32
    %1 = arith.extui %0 : i1 to i32
    %c0_i32_0 = arith.constant 0 : i32
    %2 = arith.cmpi ne, %1, %c0_i32_0 : i32
    scf.if %2 {
      %cst_18 = arith.constant 0.000000e+00 : f32
      %53 = vector.broadcast %cst_18 : f32 to vector<1x1x128xf32>
      %c0_19 = arith.constant 0 : index
      %c0_20 = arith.constant 0 : index
      %c0_21 = arith.constant 0 : index
      %54 = vector.load %arg4[%c0_19, %c0_20, %c0_21] : memref<1x1x128xf32, #tpu.memory_space<vmem>>, vector<1x1x128xf32>
      tpu.vector_store %arg4[%c0_19, %c0_20, %c0_21], %53 {strides = array<i32>} : memref<1x1x128xf32, #tpu.memory_space<vmem>>, vector<1x1x128xf32>,
    } else {
    }
    %c0 = arith.constant 0 : index
    %c0_1 = arith.constant 0 : index
    %3 = vector.load %arg2[%c0, %c0_1] : memref<16x128xf32, #tpu.memory_space<vmem>>, vector<16x128xf32>
    %c0_2 = arith.constant 0 : index
    %c0_3 = arith.constant 0 : index
    %4 = vector.load %arg3[%c0_2, %c0_3] : memref<16x128xf32, #tpu.memory_space<vmem>>, vector<16x128xf32>
    %cst = arith.constant dense<0xFF800000> : vector<16xf32>
    %5 = vector.multi_reduction <maximumf>, %3, %cst [1] : vector<16x128xf32> to vector<16xf32>
    %6 = vector.shape_cast %5 : vector<16xf32> to vector<16x1xf32>
    %7 = vector.broadcast %6 : vector<16x1xf32> to vector<16x128xf32>
    %8 = arith.subf %3, %7 : vector<16x128xf32>
    %9 = math.exp %8 : vector<16x128xf32>
    %cst_4 = arith.constant dense<0.000000e+00> : vector<16xf32>
    %10 = vector.multi_reduction <add>, %9, %cst_4 [1] : vector<16x128xf32> to vector<16xf32>
    %11 = vector.shape_cast %10 : vector<16xf32> to vector<16x1xf32>
    %12 = math.log %11 : vector<16x1xf32>
    %13 = arith.addf %6, %12 : vector<16x1xf32>
    %14 = vector.broadcast %13 : vector<16x1xf32> to vector<16x128xf32>
    %15 = arith.subf %3, %14 : vector<16x128xf32>
    %cst_5 = arith.constant dense<0xFF800000> : vector<16xf32>
    %16 = vector.multi_reduction <maximumf>, %4, %cst_5 [1] : vector<16x128xf32> to vector<16xf32>
    %17 = vector.shape_cast %16 : vector<16xf32> to vector<16x1xf32>
    %18 = vector.broadcast %17 : vector<16x1xf32> to vector<16x128xf32>
    %19 = arith.subf %4, %18 : vector<16x128xf32>
    %20 = math.exp %19 : vector<16x128xf32>
    %cst_6 = arith.constant dense<0.000000e+00> : vector<16xf32>
    %21 = vector.multi_reduction <add>, %20, %cst_6 [1] : vector<16x128xf32> to vector<16xf32>
    %22 = vector.shape_cast %21 : vector<16xf32> to vector<16x1xf32>
    %23 = math.log %22 : vector<16x1xf32>
    %24 = arith.addf %17, %23 : vector<16x1xf32>
    %25 = vector.broadcast %24 : vector<16x1xf32> to vector<16x128xf32>
    %26 = arith.subf %4, %25 : vector<16x128xf32>
    %cst_7 = arith.constant 0.000000e+00 : f32
    %27 = vector.broadcast %cst_7 : f32 to vector<16x128xf32>
    %28 = arith.cmpf oeq, %26, %27 : vector<16x128xf32>
    %cst_8 = arith.constant 0.000000e+00 : f32
    %29 = vector.broadcast %cst_8 : f32 to vector<16x128xf32>
    %30 = math.log %26 : vector<16x128xf32>
    %31 = arith.mulf %26, %30 : vector<16x128xf32>
    %32 = arith.select %28, %29, %31 : vector<16x128xi1>, vector<16x128xf32>
    %33 = arith.mulf %26, %15 : vector<16x128xf32>
    %34 = arith.subf %32, %33 : vector<16x128xf32>
    %c1_i32 = arith.constant 1 : i32
    %35 = arith.muli %arg0, %c1_i32 : i32
    %36 = arith.addi %35, %arg1 : i32
    %c16_i32 = arith.constant 16 : i32
    %37 = arith.muli %36, %c16_i32 : i32
    %38 = tpu.iota {dimensions = array<i32: 0>} : vector<16x1xi32>
    %39 = vector.broadcast %37 : i32 to vector<16x1xi32>
    %40 = arith.addi %39, %38 : vector<16x1xi32>
    %c16_i32_9 = arith.constant 16 : i32
    %41 = vector.broadcast %c16_i32_9 : i32 to vector<16x1xi32>
    %42 = arith.cmpi slt, %40, %41 : vector<16x1xi32>
    %cst_10 = arith.constant 0.000000e+00 : f32
    %43 = vector.shape_cast %42 : vector<16x1xi1> to vector<16x1xi1>
    %44 = vector.broadcast %43 : vector<16x1xi1> to vector<16x128xi1>
    %45 = vector.broadcast %cst_10 : f32 to vector<16x128xf32>
    %46 = arith.select %44, %34, %45 : vector<16x128xi1>, vector<16x128xf32>
    %c0_11 = arith.constant 0 : index
    %c0_12 = arith.constant 0 : index
    %c0_13 = arith.constant 0 : index
    %47 = vector.load %arg4[%c0_11, %c0_12, %c0_13] : memref<1x1x128xf32, #tpu.memory_space<vmem>>, vector<1x1x128xf32>
    %cst_14 = arith.constant dense<0.000000e+00> : vector<128xf32>
    %48 = vector.multi_reduction <add>, %46, %cst_14 [0] : vector<16x128xf32> to vector<128xf32>
    %49 = vector.shape_cast %48 : vector<128xf32> to vector<1x128xf32>
    %50 = vector.shape_cast %49 : vector<1x128xf32> to vector<1x1x128xf32>
    %51 = arith.addf %47, %50 : vector<1x1x128xf32>
    %c0_15 = arith.constant 0 : index
    %c0_16 = arith.constant 0 : index
    %c0_17 = arith.constant 0 : index
    %52 = vector.load %arg4[%c0_15, %c0_16, %c0_17] : memref<1x1x128xf32, #tpu.memory_space<vmem>>, vector<1x1x128xf32>
    tpu.vector_store %arg4[%c0_15, %c0_16, %c0_17], %51 {strides = array<i32>} : memref<1x1x128xf32, #tpu.memory_space<vmem>>, vector<1x1x128xf32>,
    return
  }
  func.func @transform_0(%arg0: i32, %arg1: i32) -> (i32, i32) {
    %c1_i32 = arith.constant 1 : i32
    %0 = arith.muli %arg0, %c1_i32 : i32
    %1 = arith.addi %0, %arg1 : i32
    %c0_i32 = arith.constant 0 : i32
    %2 = arith.minsi %1, %c0_i32 : i32
    %c0_i32_0 = arith.constant 0 : i32
    %c0_i32_1 = arith.constant 0 : i32
    return %2, %c0_i32_0 : i32, i32
  }
  func.func @transform_1(%arg0: i32, %arg1: i32) -> (i32, i32) {
    %c1_i32 = arith.constant 1 : i32
    %0 = arith.muli %arg0, %c1_i32 : i32
    %1 = arith.addi %0, %arg1 : i32
    %c0_i32 = arith.constant 0 : i32
    %2 = arith.minsi %1, %c0_i32 : i32
    %c0_i32_0 = arith.constant 0 : i32
    %c0_i32_1 = arith.constant 0 : i32
    return %2, %c0_i32_0 : i32, i32
  }
  func.func @transform_2(%arg0: i32, %arg1: i32) -> (i32, i32, i32) {
    %c0_i32 = arith.constant 0 : i32
    %c0_i32_0 = arith.constant 0 : i32
    %c0_i32_1 = arith.constant 0 : i32
    return %arg0, %c0_i32, %c0_i32_0 : i32, i32, i32
  }
}

</mosaic_0001>

<llo_original>
// kernel: tpu_custom_call.1
$region0: #{tpu_custom_call.1}
  #allocation0 [shape = 'u32[]', space=smem, size = 0x4, offset = 0x4, fixed_abs, tag = 'smem constant byte address 0x4 - core index']
  #allocation1 [shape = 'u32[72,128]{1,0:T(1,128)}', space=vmem, size = 0x9000, scoped, tag = 'internal scratch']
  %s0 = inlined_call_operand.hbm [shape: f32[16,128], index: 0, kind: input, shape index: {}]
  %s1 = inlined_call_operand.hbm [shape: f32[16,128], index: 1, kind: input, shape index: {}]
  %s2 = inlined_call_operand.hbm [shape: f32[2,1,128], index: 2, kind: output, shape index: {}]
  %s3 = sld [smem:[#allocation0]]
  $region53: #{tpu_custom_call.1} parent=0
    _
  %s5 = ssub.s32 1, %s3
  %s6 = scalar_select 0, %s5, %s3
  $region1: #{tpu_custom_call.1} parent=0
    #allocation2 [shape = 'u8[16384]{0}', space=vmem, size = 0x4000, scoped, tag = 'input window, operand 0']
    #allocation3 [shape = 's32[2]{0}', space=sflag, size = 0x8, scoped, tag = 'scoped memory for tpu_custom_call.1']
    #allocation4 [shape = 's32[2]{0}', space=sflag, size = 0x8, scoped, tag = 'scoped memory for tpu_custom_call.1']
    #allocation5 [shape = 'u8[16384]{0}', space=vmem, size = 0x4000, scoped, tag = 'input window, operand 1']
    #allocation6 [shape = 's32[2]{0}', space=sflag, size = 0x8, scoped, tag = 'scoped memory for tpu_custom_call.1']
    #allocation7 [shape = 'u8[1024]{0}', space=vmem, size = 0x400, scoped, tag = 'output window, operand 0']
    %7 = vsyncpa [#allocation3], 0
    %s8 = scalar_lea.sflag [#allocation3], 1
    %9 = vsyncpa %s8, 0
    %10 = vsyncpa [#allocation6], 0
    %s11 = scalar_lea.sflag [#allocation6], 1
    %12 = vsyncpa %s11, 0
    %13 = vsyncpa [#allocation4], 0
    %s14 = scalar_lea.sflag [#allocation4], 1
    %15 = vsyncpa %s14, 0
    loop: start=0, step=1, limit=4
    $region2: #{tpu_custom_call.1} parent=1 // loop_pre_header
      _
    $region3: #{tpu_custom_call.1} parent=1 // loop_header
      %s17 = sphi 0, %s21
      %p18 = scmp.ge.s32.totalorder %s17, 4
      %s24 = sphi 0, %s36
      %s25 = sphi 0, %s32
      %s26 = sphi 0, %s24
      %s27 = sphi 0, %s25
      %s28 = sphi 0, %s26
      %s29 = sphi 0, %s27
      %s45 = sphi 0, %s47
      %s48 = sphi 0, %s45
      %s49 = sphi 0, %s48
      %s65 = sphi 0, %s49
      %s77 = sphi 0, %s79
      %s80 = sphi 0, %s77
      %s81 = sphi 0, %s80
      %s97 = sphi 0, %s81
      %s103 = sphi 0, %s105
      %s106 = sphi 0, %s103
      %s107 = sphi 0, %s106
      %s123 = sphi 0, %s107
    $region4: #{tpu_custom_call.1} parent=1 // loop_header_branch
      %20 = sbr.rel (%p18) target = $region8
    $region5: #{tpu_custom_call.1} parent=1 // loop_body
      %s22 = ssub.s32 %s17, 1
      %s23 = ssub.s32 %s17, 2
      %s30 = sadd.s32 1, %s25
      %p31 = scmp.ge.s32.totalorder %s30, 1
      %s32 = scalar_select %p31, 0, %s30
      %s33 = sadd.s32 1, %s24
      %s34 = scalar_select %p31, %s33, %s24
      %p35 = scmp.ge.s32.totalorder %s34, 2
      %s36 = scalar_select %p35, 0, %s34
      %s37 = sadd.s32 %s24, %s25
      %p38 = scmp.lt.s32.totalorder %s37, 0
      %s39 = scalar_select %p38, %s37, 0
      %s40 = sadd.s32 %s36, %s32
      %p41 = scmp.lt.s32.totalorder %s40, 0
      %s42 = scalar_select %p41, %s40, 0
      %s43 = ssub.s32 %s39, %s42
      %p44 = scmp.eq.s32.totalorder %s43, 0
      %s46 = sadd.s32 %s45, 1
      %s47 = scalar_select %p44, %s45, %s46
      %p50 = pneg %p44
      %p51 = scmp.eq.s32.totalorder %s17, 1
      %p52 = por %p50, %p51
      %p53 = scmp.ne.s32.totalorder %s45, %s48
      %p54 = scmp.eq.s32.totalorder %s17, 0
      %p55 = por %p53, %p54
      %p56 = scmp.ne.s32.totalorder %s45, %s48
      %p57 = scmp.eq.s32.totalorder %s22, 1
      %p58 = por %p56, %p57
      %p59 = scmp.ne.s32.totalorder %s48, %s49
      %p60 = scmp.eq.s32.totalorder %s22, 0
      %p61 = por %p59, %p60
      %p62 = scmp.ne.s32.totalorder %s48, %s49
      %p63 = scmp.eq.s32.totalorder %s23, 1
      %p64 = por %p62, %p63
      %p66 = scmp.ne.s32.totalorder %s49, %s65
      %p67 = scmp.eq.s32.totalorder %s23, 0
      %p68 = por %p66, %p67
      %s69 = sadd.s32 %s24, %s25
      %p70 = scmp.lt.s32.totalorder %s69, 0
      %s71 = scalar_select %p70, %s69, 0
      %s72 = sadd.s32 %s36, %s32
      %p73 = scmp.lt.s32.totalorder %s72, 0
      %s74 = scalar_select %p73, %s72, 0
      %s75 = ssub.s32 %s71, %s74
      %p76 = scmp.eq.s32.totalorder %s75, 0
      %s78 = sadd.s32 %s77, 1
      %s79 = scalar_select %p76, %s77, %s78
      %p82 = pneg %p76
      %p83 = scmp.eq.s32.totalorder %s17, 1
      %p84 = por %p82, %p83
      %p85 = scmp.ne.s32.totalorder %s77, %s80
      %p86 = scmp.eq.s32.totalorder %s17, 0
      %p87 = por %p85, %p86
      %p88 = scmp.ne.s32.totalorder %s77, %s80
      %p89 = scmp.eq.s32.totalorder %s22, 1
      %p90 = por %p88, %p89
      %p91 = scmp.ne.s32.totalorder %s80, %s81
      %p92 = scmp.eq.s32.totalorder %s22, 0
      %p93 = por %p91, %p92
      %p94 = scmp.ne.s32.totalorder %s80, %s81
      %p95 = scmp.eq.s32.totalorder %s23, 1
      %p96 = por %p94, %p95
      %p98 = scmp.ne.s32.totalorder %s81, %s97
      %p99 = scmp.eq.s32.totalorder %s23, 0
      %p100 = por %p98, %p99
      %s101 = ssub.s32 %s24, %s36
      %p102 = scmp.eq.s32.totalorder %s101, 0
      %s104 = sadd.s32 %s103, 1
      %s105 = scalar_select %p102, %s103, %s104
      %p108 = pneg %p102
      %p109 = scmp.eq.s32.totalorder %s17, 1
      %p110 = por %p108, %p109
      %p111 = scmp.ne.s32.totalorder %s103, %s106
      %p112 = scmp.eq.s32.totalorder %s17, 0
      %p113 = por %p111, %p112
      %p114 = scmp.ne.s32.totalorder %s103, %s106
      %p115 = scmp.eq.s32.totalorder %s22, 1
      %p116 = por %p114, %p115
      %p117 = scmp.ne.s32.totalorder %s106, %s107
      %p118 = scmp.eq.s32.totalorder %s22, 0
      %p119 = por %p117, %p118
      %p120 = scmp.ne.s32.totalorder %s106, %s107
      %p121 = scmp.eq.s32.totalorder %s23, 1
      %p122 = por %p120, %p121
      %p124 = scmp.ne.s32.totalorder %s107, %s123
      %p125 = scmp.eq.s32.totalorder %s23, 0
      %p126 = por %p124, %p125
      %p127 = scmp.le.s32.totalorder 1, %s17
      %p128 = scmp.lt.s32.totalorder %s17, 3
      %p129 = pnand %p127, %p128
      %p130 = pneg %p129
      // Predicated region
      $region9: #{tpu_custom_call.1} parent=5 // pred_check
        _
      $region10: #{tpu_custom_call.1} parent=5 // pred_check_branch
        %132 = sbr.rel (%p129) target = $region12
      $region11: #{tpu_custom_call.1} parent=5 // pred_region
        %s133 = ssub.s32 %s17, 1
      $region12: #{tpu_custom_call.1} parent=5 // pred_fallthru
        _
      %p134 = scmp.lt.s32.totalorder %s17, 2
      // Predicated region
      $region13: #{tpu_custom_call.1} parent=5 // pred_check
        %p135 = pneg %p134
      $region14: #{tpu_custom_call.1} parent=5 // pred_check_branch
        %137 = sbr.rel (%p135) target = $region16
      $region15: #{tpu_custom_call.1} parent=5 // pred_region
        // Predicated region
        $region17: #{tpu_custom_call.1} parent=15 // pred_check
          %p138 = pneg %p55
        $region18: #{tpu_custom_call.1} parent=15 // pred_check_branch
          %140 = sbr.rel (%p138) target = $region20
        $region19: #{tpu_custom_call.1} parent=15 // pred_region
          %s141 = sand.u32 %s45, 1
          %s142 = scalar_lea.sflag [#allocation3], %s141
          %s143 = sand.u32 %s45, 1
          %s144 = smul.addr %s143, 16
          %s145 = scalar_lea.vmem [#allocation2], %s144
          %s146 = sadd.s32 %s24, %s25
          %p147 = scmp.lt.s32.totalorder %s146, 0
          %s148 = scalar_select %p147, %s146, 0
          %s149 = smul.u32 2, %s148
          %151 = vsyncadd %s142, 0
          %s152 = smul.addr %s149, 8
          %s153 = scalar_lea.hbm %s0, %s152
          %s154 = sshll.u32 %s153, 4
          %s155 = int_to_ptr.hbm [resolvable:$true] %s154
          %s156 = sshll.u32 %s145, 4
          %s157 = int_to_ptr.vmem [resolvable:$true] %s156
          %162 = dma.hbm_to_vmem [thread:$0]  %s155, 256, %s157, %s142, 128, 128, 8
        $region20: #{tpu_custom_call.1} parent=15 // pred_fallthru
          _
        // Predicated region
        $region21: #{tpu_custom_call.1} parent=15 // pred_check
          %p163 = pneg %p87
        $region22: #{tpu_custom_call.1} parent=15 // pred_check_branch
          %165 = sbr.rel (%p163) target = $region24
        $region23: #{tpu_custom_call.1} parent=15 // pred_region
          %s166 = sand.u32 %s77, 1
          %s167 = scalar_lea.sflag [#allocation6], %s166
          %s168 = sand.u32 %s77, 1
          %s169 = smul.addr %s168, 16
          %s170 = scalar_lea.vmem [#allocation5], %s169
          %s171 = sadd.s32 %s24, %s25
          %p172 = scmp.lt.s32.totalorder %s171, 0
          %s173 = scalar_select %p172, %s171, 0
          %s174 = smul.u32 2, %s173
          %176 = vsyncadd %s167, 0
          %s177 = smul.addr %s174, 8
          %s178 = scalar_lea.hbm %s1, %s177
          %s179 = sshll.u32 %s178, 4
          %s180 = int_to_ptr.hbm [resolvable:$true] %s179
          %s181 = sshll.u32 %s170, 4
          %s182 = int_to_ptr.vmem [resolvable:$true] %s181
          %187 = dma.hbm_to_vmem [thread:$0]  %s180, 256, %s182, %s167, 128, 128, 8
        $region24: #{tpu_custom_call.1} parent=15 // pred_fallthru
          _
      $region16: #{tpu_custom_call.1} parent=5 // pred_fallthru
        _
      %p188 = scmp.le.s32.totalorder 1, %s17
      %p189 = scmp.lt.s32.totalorder %s17, 3
      %p190 = pnand %p188, %p189
      %p191 = pneg %p190
      // Predicated region
      $region25: #{tpu_custom_call.1} parent=5 // pred_check
        _
      $region26: #{tpu_custom_call.1} parent=5 // pred_check_branch
        %193 = sbr.rel (%p190) target = $region28
      $region27: #{tpu_custom_call.1} parent=5 // pred_region
        %s194 = ssub.s32 %s17, 1
        %s195 = sand.u32 %s48, 1
        %s196 = scalar_lea.sflag [#allocation3], %s195
        %s197 = sand.u32 %s48, 1
        %s198 = smul.addr %s197, 16
        %s199 = scalar_lea.vmem [#allocation2], %s198
        // Predicated region
        $region29: #{tpu_custom_call.1} parent=27 // pred_check
          %p200 = pneg %p61
        $region30: #{tpu_custom_call.1} parent=27 // pred_check_branch
          %202 = sbr.rel (%p200) target = $region32
        $region31: #{tpu_custom_call.1} parent=27 // pred_region
          %204 = dma.done %s196, 256
        $region32: #{tpu_custom_call.1} parent=27 // pred_fallthru
          _
        %s205 = sand.u32 %s80, 1
        %s206 = scalar_lea.sflag [#allocation6], %s205
        %s207 = sand.u32 %s80, 1
        %s208 = smul.addr %s207, 16
        %s209 = scalar_lea.vmem [#allocation5], %s208
        // Predicated region
        $region33: #{tpu_custom_call.1} parent=27 // pred_check
          %p210 = pneg %p93
        $region34: #{tpu_custom_call.1} parent=27 // pred_check_branch
          %212 = sbr.rel (%p210) target = $region36
        $region35: #{tpu_custom_call.1} parent=27 // pred_region
          %214 = dma.done %s206, 256
        $region36: #{tpu_custom_call.1} parent=27 // pred_fallthru
          _
        %s215 = sand.u32 %s48, 1
        %s216 = scalar_lea.sflag [#allocation3], %s215
        %s217 = sand.u32 %s48, 1
        %s218 = smul.addr %s217, 16
        %s219 = scalar_lea.vmem [#allocation2], %s218
        %p220 = pneg %p61
        %p221 = pneg %p58
        %s222 = sand.u32 %s80, 1
        %s223 = scalar_lea.sflag [#allocation6], %s222
        %s224 = sand.u32 %s80, 1
        %s225 = smul.addr %s224, 16
        %s226 = scalar_lea.vmem [#allocation5], %s225
        %p227 = pneg %p93
        %p228 = pneg %p90
        %p229 = pneg %p119
        %p230 = pneg %p116
        %s231 = sand.u32 %s106, 1
        %s232 = scalar_lea.sflag [#allocation4], %s231
        %s233 = sand.u32 %s106, 1
        %s234 = scalar_lea.vmem [#allocation7], %s233
        %s235 = sadd.s32 %s26, %s27
        %p236 = scmp.lt.s32.totalorder %s235, 0
        %s237 = scalar_select %p236, %s235, 0
        %s238 = smul.u32 2, %s237
        %s239 = sadd.s32 %s26, %s27
        %p240 = scmp.lt.s32.totalorder %s239, 0
        %s241 = scalar_select %p240, %s239, 0
        %s242 = smul.u32 2, %s241
        %p243 = scmp.eq.s32.totalorder %s27, 0
        // Predicated region
        $region37: #{tpu_custom_call.1} parent=27 // pred_check
          %p244 = pneg %p243
        $region38: #{tpu_custom_call.1} parent=27 // pred_check_branch
          %246 = sbr.rel (%p244) target = $region40
        $region39: #{tpu_custom_call.1} parent=27 // pred_region
          %247 = vst [vmem:[%s234] sm:$0x1] 0.0
        $region40: #{tpu_custom_call.1} parent=27 // pred_fallthru
          _
        %v248 = vld [vmem:[%s199] sm:$0xff]
        %v249 = vld [vmem:[%s199 + $0x8] sm:$0xff]
        %v250 = vld [vmem:[%s209] sm:$0xff]
        %v251 = vld [vmem:[%s209 + $0x8] sm:$0xff]
        %252 = vmax.xlane.f32.xlu0 %v248
        %v253 = vpop.xlane.xlu0 %252
        %254 = vmax.xlane.f32.xlu0 %v249
        %v255 = vpop.xlane.xlu0 %254
        %v256 = vsub.f32 %v248, %v253
        %v257 = vsub.f32 %v249, %v255
        %v258 = vmul.f32 %v256, 1.442695
        %v259 = vpow.pop %v258
        %v260 = vmul.f32 %v257, 1.442695
        %v261 = vpow.pop %v260
        %262 = vadd.xlane.f32.xlu0 %v259
        %v263 = vpop.xlane.xlu0 %262
        %264 = vadd.xlane.f32.xlu0 %v261
        %v265 = vpop.xlane.xlu0 %264
        %v266 = vlog2.pop %v263
        %v267 = vmul.f32 %v266, 0.6931472
        %v268 = vlog2.pop %v265
        %v269 = vmul.f32 %v268, 0.6931472
        %v270 = vadd.f32 %v253, %v267
        %v271 = vadd.f32 %v255, %v269
        %v272 = vsub.f32 %v248, %v270
        %v273 = vsub.f32 %v249, %v271
        %274 = vmax.xlane.f32.xlu0 %v250
        %v275 = vpop.xlane.xlu0 %274
        %276 = vmax.xlane.f32.xlu0 %v251
        %v277 = vpop.xlane.xlu0 %276
        %v278 = vsub.f32 %v250, %v275
        %v279 = vsub.f32 %v251, %v277
        %v280 = vmul.f32 %v278, 1.442695
        %v281 = vpow.pop %v280
        %v282 = vmul.f32 %v279, 1.442695
        %v283 = vpow.pop %v282
        %284 = vadd.xlane.f32.xlu0 %v281
        %v285 = vpop.xlane.xlu0 %284
        %286 = vadd.xlane.f32.xlu0 %v283
        %v287 = vpop.xlane.xlu0 %286
        %v288 = vlog2.pop %v285
        %v289 = vmul.f32 %v288, 0.6931472
        %v290 = vlog2.pop %v287
        %v291 = vmul.f32 %v290, 0.6931472
        %v292 = vadd.f32 %v275, %v289
        %v293 = vadd.f32 %v277, %v291
        %v294 = vsub.f32 %v250, %v292
        %v295 = vsub.f32 %v251, %v293
        %vm296 = vcmp.eq.f32.partialorder %v294, 0.0
        %vm297 = vcmp.eq.f32.partialorder %v295, 0.0
        %v298 = vlog2.pop %v294
        %v299 = vmul.f32 %v298, 0.6931472
        %v300 = vlog2.pop %v295
        %v301 = vmul.f32 %v300, 0.6931472
        %v302 = vmul.f32 %v294, %v299
        %v303 = vmul.f32 %v295, %v301
        %v304 = vsel %vm296, 0.0, %v302
        %v305 = vsel %vm297, 0.0, %v303
        %v306 = vmul.f32 %v294, %v272
        %v307 = vmul.f32 %v295, %v273
        %v308 = vsub.f32 %v304, %v306
        %v309 = vsub.f32 %v305, %v307
        %s310 = sadd.s32 %s26, %s27
        %s311 = smul.u32 %s310, 16
        %v312 = vlaneseq
        %v313 = vshrl.u32 %v312, 7
        %v314 = vadd.s32 %v313, 8
        %v315 = vstv %s311
        %v316 = vadd.s32 %v315, %v313
        %v317 = vadd.s32 %v315, %v314
        %vm318 = vcmp.lt.s32.totalorder %v316, 16
        %vm319 = vcmp.lt.s32.totalorder %v317, 16
        %v320 = vsel %vm318, 1, 0
        %v321 = vsel %vm319, 1, 0
        %vm322 = vcmp.eq.s32.totalorder %v320, 1
        %vm323 = vcmp.eq.s32.totalorder %v321, 1
        %v324 = vsel %vm322, %v308, 0.0
        %v325 = vsel %vm323, %v309, 0.0
        %v326 = vld [vmem:[%s234] sm:$0x1]
        %v327 = vadd.f32 %v324, %v325
        %v328 = vrot.slane %v327, 4
        %v329 = vadd.f32 %v327, %v328
        %v330 = vrot.slane %v329, 2
        %v331 = vadd.f32 %v329, %v330
        %v332 = vrot.slane %v331, 1
        %v333 = vadd.f32 %v331, %v332
        %v334 = vadd.f32 %v326, %v333
        %335 = vst [vmem:[%s234] sm:$0x1] %v334
        %s336 = sand.u32 %s106, 1
        %s337 = scalar_lea.sflag [#allocation4], %s336
        %s338 = sand.u32 %s106, 1
        %s339 = scalar_lea.vmem [#allocation7], %s338
        // Predicated region
        $region41: #{tpu_custom_call.1} parent=27 // pred_check
          %p340 = pneg %p116
        $region42: #{tpu_custom_call.1} parent=27 // pred_check_branch
          %342 = sbr.rel (%p340) target = $region44
        $region43: #{tpu_custom_call.1} parent=27 // pred_region
          %344 = vsyncadd %s337, 0
          %s345 = scalar_lea.hbm %s2, %s26
          %s347 = sshll.u32 %s339, 4
          %s348 = int_to_ptr.vmem [resolvable:$true] %s347
          %s349 = sshll.u32 %s345, 4
          %s350 = int_to_ptr.hbm [resolvable:$true] %s349
          %352 = dma.vmem_to_hbm [thread:$0]  %s348, 16, %s350, %s337
        $region44: #{tpu_custom_call.1} parent=27 // pred_fallthru
          _
      $region28: #{tpu_custom_call.1} parent=5 // pred_fallthru
        _
      %p353 = scmp.le.s32.totalorder 2, %s17
      // Predicated region
      $region45: #{tpu_custom_call.1} parent=5 // pred_check
        %p354 = pneg %p353
      $region46: #{tpu_custom_call.1} parent=5 // pred_check_branch
        %356 = sbr.rel (%p354) target = $region48
      $region47: #{tpu_custom_call.1} parent=5 // pred_region
        %s357 = ssub.s32 %s17, 2
        // Predicated region
        $region49: #{tpu_custom_call.1} parent=47 // pred_check
          %p358 = pneg %p122
        $region50: #{tpu_custom_call.1} parent=47 // pred_check_branch
          %360 = sbr.rel (%p358) target = $region52
        $region51: #{tpu_custom_call.1} parent=47 // pred_region
          %s361 = sand.u32 %s107, 1
          %s362 = scalar_lea.sflag [#allocation4], %s361
          %s363 = sand.u32 %s107, 1
          %s364 = scalar_lea.vmem [#allocation7], %s363
          %366 = dma.done %s362, 16
        $region52: #{tpu_custom_call.1} parent=47 // pred_fallthru
          _
      $region48: #{tpu_custom_call.1} parent=5 // pred_fallthru
        _
    $region6: #{tpu_custom_call.1} parent=1 // loop_footer
      %s21 = sadd.s32 1, %s17
    $region7: #{tpu_custom_call.1} parent=1 // loop_footer_branch
      %16 = sbr.rel target = $region3
    $region8: #{tpu_custom_call.1} parent=1 // loop_exit
      _
    %367 = vsyncpa [#allocation3], 1
    %s368 = scalar_lea.sflag [#allocation3], 1
    %369 = vsyncpa %s368, 1
    %370 = vsyncpa [#allocation6], 1
    %s371 = scalar_lea.sflag [#allocation6], 1
    %372 = vsyncpa %s371, 1
    %373 = vsyncpa [#allocation4], 1
    %s374 = scalar_lea.sflag [#allocation4], 1
    %375 = vsyncpa %s374, 1

</llo_original>
